<compile_context>
chip_gen: v7x
topology: tpu7x:2x2x1
jax: 0.10.0
libtpu: 0.0.40
codegen_flags: <defaults>
</compile_context>

<pallas_src>
import functools
import math

import jax
import jax.numpy as jnp
from jax.experimental import pallas as pl
from jax.experimental.pallas import tpu as pltpu


def _prob_attention_kernel(q_ref, k_ref, v_ref, cnt_ref, out_ref, *,
                           u, scale, l_k):
    q = q_ref[...]                       # (L_Q, D)  input dtype
    k = k_ref[...]                       # (L_K, D)
    v = v_ref[...]                       # (L_K, D)
    cnt = cnt_ref[...]                   # (L_Q, L_K) f32 sampled-key counts

    l_q = q.shape[0]

    # Dense Q K^T, fp32 MXU accumulation (operands kept in input dtype).
    scores = jax.lax.dot_general(
        q, k, (((1,), (1,)), ((), ())),
        preferred_element_type=jnp.float32)              # (L_Q, L_K) f32

    # Sparsity measure over the sampled keys (duplicates weighted via cnt):
    #   M_i = max_{sampled j} S_ij - (1/L_K) * sum_{sampled j} S_ij
    sampled = cnt > 0
    s_max = jnp.max(jnp.where(sampled, scores, -jnp.inf), axis=-1, keepdims=True)
    s_sum = jnp.sum(scores * cnt, axis=-1, keepdims=True)
    m_col = s_max - s_sum * (1.0 / l_k)                  # (L_Q, 1)

    # Top-u membership without sort/top_k: rank_i = #{j : M_j > M_i}; i is in
    # the top-u iff rank_i < u.  Build a lane-oriented copy of M with an
    # identity mask (avoids a (L,1)->(1,L) transpose relayout).
    rows = jax.lax.broadcasted_iota(jnp.int32, (l_q, l_q), 0)
    cols = jax.lax.broadcasted_iota(jnp.int32, (l_q, l_q), 1)
    eye = (rows == cols).astype(jnp.float32)             # (L_Q, L_Q)
    m_row = jnp.sum(eye * m_col, axis=0, keepdims=True)  # (1, L_Q)
    rank = jnp.sum((m_row > m_col).astype(jnp.float32), axis=-1, keepdims=True)
    selected = rank < jnp.float32(u)                     # (L_Q, 1) bool

    # softmax(scale * scores) in fp32; reciprocal goes to the EUP slot.
    s = scores * scale
    s = s - jnp.max(s, axis=-1, keepdims=True)
    p = jnp.exp(s)
    attn = p * pl.reciprocal(jnp.sum(p, axis=-1, keepdims=True), approx=True)
    attn_out = jax.lax.dot_general(
        attn.astype(v.dtype), v, (((1,), (0,)), ((), ())),
        preferred_element_type=jnp.float32)              # (L_Q, D)

    # mask_flag=False initial context: mean of V over the key axis.
    v_mean = jnp.mean(v.astype(jnp.float32), axis=0, keepdims=True)  # (1, D)

    out = jnp.where(selected, attn_out, v_mean)          # (L_Q, D)
    out_ref[...] = out.astype(out_ref.dtype)


def prob_attention(queries, keys, values, attn_mask, index_sample, *,
                   factor=5, scale=None):
    """queries/keys/values: (B, L, H, D) like the PyTorch forward.

    index_sample: (L_Q, U_part) int32 sampled key indices (shared over B, H),
    the JAX stand-in for torch.randint inside _prob_QK.
    attn_mask is unused (mask_flag=False path).
    Returns (context (B, L_Q, H, D), None).
    """
    del attn_mask
    B, L_Q, H, D = queries.shape
    _, L_K, _, _ = keys.shape

    u = min(factor * int(math.ceil(math.log(L_Q))), L_Q)
    scale_val = scale if scale is not None else 1.0 / math.sqrt(D)

    # (B, H, L, D) layout for the kernel (same transpose as the PyTorch code).
    q = jnp.transpose(queries, (0, 2, 1, 3))
    k = jnp.transpose(keys, (0, 2, 1, 3))
    v = jnp.transpose(values, (0, 2, 1, 3))

    # Per-query sampled-key count matrix (duplicates counted) shared over B, H.
    cnt = jnp.zeros((L_Q, L_K), jnp.float32).at[
        jnp.arange(L_Q)[:, None], index_sample].add(1.0)

    kernel = functools.partial(_prob_attention_kernel,
                               u=u, scale=scale_val, l_k=L_K)

    out = pl.pallas_call(
        kernel,
        out_shape=jax.ShapeDtypeStruct((B, H, L_Q, D), queries.dtype),
        grid=(B, H),
        in_specs=[
            pl.BlockSpec((None, None, L_Q, D), lambda b, h: (b, h, 0, 0)),  # Q
            pl.BlockSpec((None, None, L_K, D), lambda b, h: (b, h, 0, 0)),  # K
            pl.BlockSpec((None, None, L_K, D), lambda b, h: (b, h, 0, 0)),  # V
            pl.BlockSpec((L_Q, L_K), lambda b, h: (0, 0)),                  # cnt
        ],
        out_specs=pl.BlockSpec((None, None, L_Q, D), lambda b, h: (b, h, 0, 0)),
        compiler_params=pltpu.CompilerParams(
            dimension_semantics=("parallel", "parallel"),
            vmem_limit_bytes=32 * 1024 * 1024),
    )(q, k, v, cnt)

    context = jnp.transpose(out, (0, 2, 1, 3))   # (B, L_Q, H, D)
    return context, None                          # output_attention=False


def _reference(queries, keys, values, index_sample, *, factor=5, scale=None):
    """Plain-JAX reference mirroring the PyTorch ProbAttention forward
    (mask_flag=False, output_attention=False), using the same index_sample."""
    B, L_Q, H, D = queries.shape
    _, L_K, _, _ = keys.shape
    u = min(factor * int(math.ceil(math.log(L_Q))), L_Q)
    scale_val = scale if scale is not None else 1.0 / math.sqrt(D)

    q = jnp.transpose(queries, (0, 2, 1, 3))
    k = jnp.transpose(keys, (0, 2, 1, 3))
    v = jnp.transpose(values, (0, 2, 1, 3))

    k_sample = k[:, :, index_sample, :]                     # (B,H,L_Q,U,D)
    qk_sample = jnp.einsum("bhqd,bhqsd->bhqs", q, k_sample)
    M = qk_sample.max(-1) - qk_sample.sum(-1) / L_K         # (B,H,L_Q)
    m_top = jax.lax.top_k(M, u)[1]                           # (B,H,u)

    q_reduce = jnp.take_along_axis(q, m_top[..., None], axis=2)     # (B,H,u,D)
    scores = jnp.einsum("bhud,bhkd->bhuk", q_reduce, k) * scale_val
    attn = jax.nn.softmax(scores, axis=-1)
    ctx_top = jnp.einsum("bhuk,bhkd->bhud", attn, v)

    context = jnp.zeros((B, H, L_Q, D), v.dtype) + v.mean(axis=2, keepdims=True)
    b_idx = jnp.arange(B)[:, None, None]
    h_idx = jnp.arange(H)[None, :, None]
    context = context.at[b_idx, h_idx, m_top].set(ctx_top)
    return jnp.transpose(context, (0, 2, 1, 3))              # (B, L_Q, H, D)


if __name__ == "__main__":
    B, L, H, D = 2, 64, 4, 32      # L_Q = L_K = 64 -> u = U_part = 25 (non-degenerate top-u)
    factor = 5

    key = jax.random.PRNGKey(0)
    kq, kk, kv, ks = jax.random.split(key, 4)
    queries = jax.random.normal(kq, (B, L, H, D), jnp.float32)
    keys = jax.random.normal(kk, (B, L, H, D), jnp.float32)
    values = jax.random.normal(kv, (B, L, H, D), jnp.float32)

    sample_k = min(factor * int(math.ceil(math.log(L))), L)          # U_part
    index_sample = jax.random.randint(ks, (L, sample_k), 0, L)

    out, attn = prob_attention(queries, keys, values, None, index_sample,
                               factor=factor)
    out = jax.block_until_ready(out)

    ref = _reference(queries, keys, values, index_sample, factor=factor)
    assert out.shape == (B, L, H, D)
    assert attn is None
    max_err = float(jnp.max(jnp.abs(out - ref)))
    assert jnp.allclose(out, ref, atol=5e-3, rtol=5e-3), (
        f"mismatch vs reference (max abs err {max_err})")

    print("KERNEL_OK")
</pallas_src>

<mosaic_0001>
module attributes {stable_mosaic.version = 11 : i64} {
  func.func @_prob_attention_kernel(%arg0: i32, %arg1: i32, %arg2: memref<1x1x64x32xf32, #tpu.memory_space<vmem>>, %arg3: memref<1x1x64x32xf32, #tpu.memory_space<vmem>>, %arg4: memref<1x1x64x32xf32, #tpu.memory_space<vmem>>, %arg5: memref<64x64xf32, #tpu.memory_space<vmem>>, %arg6: memref<1x1x64x32xf32, #tpu.memory_space<vmem>>) attributes {dimension_semantics = [#tpu.dimension_semantics<parallel>, #tpu.dimension_semantics<parallel>], iteration_bounds = array<i64: 2, 4>, scalar_prefetch = 0 : i64, scratch_operands = 0 : i64, tpu.core_type = #tpu.core_type<tc>, window_params = [{transform_indices = @transform_0, window_bounds = array<i64: 1, 1, 64, 32>}, {transform_indices = @transform_1, window_bounds = array<i64: 1, 1, 64, 32>}, {transform_indices = @transform_2, window_bounds = array<i64: 1, 1, 64, 32>}, {pipeline_mode = #tpu.pipeline_mode<synchronous>, transform_indices = @transform_3, window_bounds = array<i64: 64, 64>}, {transform_indices = @transform_4, window_bounds = array<i64: 1, 1, 64, 32>}]} {
    %c0 = arith.constant 0 : index
    %c0_0 = arith.constant 0 : index
    %c0_1 = arith.constant 0 : index
    %c0_2 = arith.constant 0 : index
    %0 = vector.load %arg2[%c0, %c0_0, %c0_1, %c0_2] : memref<1x1x64x32xf32, #tpu.memory_space<vmem>>, vector<1x1x64x32xf32>
    %1 = vector.shape_cast %0 : vector<1x1x64x32xf32> to vector<64x32xf32>
    %c0_3 = arith.constant 0 : index
    %c0_4 = arith.constant 0 : index
    %c0_5 = arith.constant 0 : index
    %c0_6 = arith.constant 0 : index
    %2 = vector.load %arg3[%c0_3, %c0_4, %c0_5, %c0_6] : memref<1x1x64x32xf32, #tpu.memory_space<vmem>>, vector<1x1x64x32xf32>
    %3 = vector.shape_cast %2 : vector<1x1x64x32xf32> to vector<64x32xf32>
    %c0_7 = arith.constant 0 : index
    %c0_8 = arith.constant 0 : index
    %c0_9 = arith.constant 0 : index
    %c0_10 = arith.constant 0 : index
    %4 = vector.load %arg4[%c0_7, %c0_8, %c0_9, %c0_10] : memref<1x1x64x32xf32, #tpu.memory_space<vmem>>, vector<1x1x64x32xf32>
    %5 = vector.shape_cast %4 : vector<1x1x64x32xf32> to vector<64x32xf32>
    %c0_11 = arith.constant 0 : index
    %c0_12 = arith.constant 0 : index
    %6 = vector.load %arg5[%c0_11, %c0_12] : memref<64x64xf32, #tpu.memory_space<vmem>>, vector<64x64xf32>
    %cst = arith.constant dense<0.000000e+00> : vector<64x64xf32>
    %7 = tpu.matmul %1, %3, %cst {dimension_numbers = #tpu.dot_dimension_numbers<[1], [1], [0], [0], [0, 0, 1, 0], [], []>} : vector<64x32xf32>, vector<64x32xf32>, vector<64x64xf32> -> vector<64x64xf32>
    %cst_13 = arith.constant 0.000000e+00 : f32
    %8 = vector.broadcast %cst_13 : f32 to vector<64x64xf32>
    %9 = arith.cmpf ogt, %6, %8 : vector<64x64xf32>
    %cst_14 = arith.constant 0xFF800000 : f32
    %10 = vector.broadcast %cst_14 : f32 to vector<64x64xf32>
    %11 = arith.select %9, %7, %10 : vector<64x64xi1>, vector<64x64xf32>
    %cst_15 = arith.constant dense<0xFF800000> : vector<64xf32>
    %12 = vector.multi_reduction <maximumf>, %11, %cst_15 [1] : vector<64x64xf32> to vector<64xf32>
    %13 = vector.shape_cast %12 : vector<64xf32> to vector<64x1xf32>
    %14 = arith.mulf %7, %6 : vector<64x64xf32>
    %cst_16 = arith.constant dense<0.000000e+00> : vector<64xf32>
    %15 = vector.multi_reduction <add>, %14, %cst_16 [1] : vector<64x64xf32> to vector<64xf32>
    %16 = vector.shape_cast %15 : vector<64xf32> to vector<64x1xf32>
    %cst_17 = arith.constant 1.562500e-02 : f32
    %17 = vector.broadcast %cst_17 : f32 to vector<64x1xf32>
    %18 = arith.mulf %16, %17 : vector<64x1xf32>
    %19 = arith.subf %13, %18 : vector<64x1xf32>
    %20 = tpu.iota {dimensions = array<i32: 0>} : vector<64x64xi32>
    %21 = tpu.iota {dimensions = array<i32: 1>} : vector<64x64xi32>
    %22 = arith.cmpi eq, %20, %21 : vector<64x64xi32>
    %23 = arith.extui %22 : vector<64x64xi1> to vector<64x64xi32>
    %24 = arith.sitofp %23 : vector<64x64xi32> to vector<64x64xf32>
    %25 = vector.broadcast %19 : vector<64x1xf32> to vector<64x64xf32>
    %26 = arith.mulf %24, %25 : vector<64x64xf32>
    %cst_18 = arith.constant dense<0.000000e+00> : vector<64xf32>
    %27 = vector.multi_reduction <add>, %26, %cst_18 [0] : vector<64x64xf32> to vector<64xf32>
    %28 = vector.shape_cast %27 : vector<64xf32> to vector<1x64xf32>
    %29 = vector.broadcast %28 : vector<1x64xf32> to vector<64x64xf32>
    %30 = vector.broadcast %19 : vector<64x1xf32> to vector<64x64xf32>
    %31 = arith.cmpf ogt, %29, %30 : vector<64x64xf32>
    %32 = arith.extui %31 : vector<64x64xi1> to vector<64x64xi32>
    %33 = arith.sitofp %32 : vector<64x64xi32> to vector<64x64xf32>
    %cst_19 = arith.constant dense<0.000000e+00> : vector<64xf32>
    %34 = vector.multi_reduction <add>, %33, %cst_19 [1] : vector<64x64xf32> to vector<64xf32>
    %35 = vector.shape_cast %34 : vector<64xf32> to vector<64x1xf32>
    %cst_20 = arith.constant 2.500000e+01 : f32
    %36 = vector.broadcast %cst_20 : f32 to vector<64x1xf32>
    %37 = arith.cmpf olt, %35, %36 : vector<64x1xf32>
    %cst_21 = arith.constant 0.176776692 : f32
    %38 = vector.broadcast %cst_21 : f32 to vector<64x64xf32>
    %39 = arith.mulf %7, %38 : vector<64x64xf32>
    %cst_22 = arith.constant dense<0xFF800000> : vector<64xf32>
    %40 = vector.multi_reduction <maximumf>, %39, %cst_22 [1] : vector<64x64xf32> to vector<64xf32>
    %41 = vector.shape_cast %40 : vector<64xf32> to vector<64x1xf32>
    %42 = vector.broadcast %41 : vector<64x1xf32> to vector<64x64xf32>
    %43 = arith.subf %39, %42 : vector<64x64xf32>
    %44 = math.exp %43 : vector<64x64xf32>
    %cst_23 = arith.constant dense<0.000000e+00> : vector<64xf32>
    %45 = vector.multi_reduction <add>, %44, %cst_23 [1] : vector<64x64xf32> to vector<64xf32>
    %46 = vector.shape_cast %45 : vector<64xf32> to vector<64x1xf32>
    %47 = tpu.reciprocal %46 {approx = true} : vector<64x1xf32> -> vector<64x1xf32>
    %48 = vector.broadcast %47 : vector<64x1xf32> to vector<64x64xf32>
    %49 = arith.mulf %44, %48 : vector<64x64xf32>
    %cst_24 = arith.constant dense<0.000000e+00> : vector<64x32xf32>
    %50 = tpu.matmul %49, %5, %cst_24 {dimension_numbers = #tpu.dot_dimension_numbers<[1], [0], [0], [1], [0, 0, 1, 1], [], []>} : vector<64x64xf32>, vector<64x32xf32>, vector<64x32xf32> -> vector<64x32xf32>
    %cst_25 = arith.constant dense<0.000000e+00> : vector<32xf32>
    %51 = vector.multi_reduction <add>, %5, %cst_25 [0] : vector<64x32xf32> to vector<32xf32>
    %52 = vector.shape_cast %51 : vector<32xf32> to vector<1x32xf32>
    %cst_26 = arith.constant 6.400000e+01 : f32
    %53 = vector.broadcast %cst_26 : f32 to vector<1x32xf32>
    %54 = arith.divf %52, %53 : vector<1x32xf32>
    %55 = vector.shape_cast %37 : vector<64x1xi1> to vector<64x1xi1>
    %56 = vector.broadcast %55 : vector<64x1xi1> to vector<64x32xi1>
    %57 = vector.shape_cast %54 : vector<1x32xf32> to vector<1x32xf32>
    %58 = vector.broadcast %57 : vector<1x32xf32> to vector<64x32xf32>
    %59 = arith.select %56, %50, %58 : vector<64x32xi1>, vector<64x32xf32>
    %c0_27 = arith.constant 0 : index
    %c0_28 = arith.constant 0 : index
    %c0_29 = arith.constant 0 : index
    %c0_30 = arith.constant 0 : index
    %60 = vector.load %arg6[%c0_27, %c0_28, %c0_29, %c0_30] : memref<1x1x64x32xf32, #tpu.memory_space<vmem>>, vector<1x1x64x32xf32>
    %61 = vector.shape_cast %60 : vector<1x1x64x32xf32> to vector<64x32xf32>
    %62 = vector.shape_cast %59 : vector<64x32xf32> to vector<1x1x64x32xf32>
    tpu.vector_store %arg6[%c0_27, %c0_28, %c0_29, %c0_30], %62 {strides = array<i32>} : memref<1x1x64x32xf32, #tpu.memory_space<vmem>>, vector<1x1x64x32xf32>,
    return
  }
  func.func @transform_0(%arg0: i32, %arg1: i32) -> (i32, i32, i32, i32) {
    %c0_i32 = arith.constant 0 : i32
    %c0_i32_0 = arith.constant 0 : i32
    %c0_i32_1 = arith.constant 0 : i32
    return %arg0, %arg1, %c0_i32, %c0_i32_0 : i32, i32, i32, i32
  }
  func.func @transform_1(%arg0: i32, %arg1: i32) -> (i32, i32, i32, i32) {
    %c0_i32 = arith.constant 0 : i32
    %c0_i32_0 = arith.constant 0 : i32
    %c0_i32_1 = arith.constant 0 : i32
    return %arg0, %arg1, %c0_i32, %c0_i32_0 : i32, i32, i32, i32
  }
  func.func @transform_2(%arg0: i32, %arg1: i32) -> (i32, i32, i32, i32) {
    %c0_i32 = arith.constant 0 : i32
    %c0_i32_0 = arith.constant 0 : i32
    %c0_i32_1 = arith.constant 0 : i32
    return %arg0, %arg1, %c0_i32, %c0_i32_0 : i32, i32, i32, i32
  }
  func.func @transform_3(%arg0: i32, %arg1: i32) -> (i32, i32) {
    %c0_i32 = arith.constant 0 : i32
    %c0_i32_0 = arith.constant 0 : i32
    %c0_i32_1 = arith.constant 0 : i32
    return %c0_i32, %c0_i32_0 : i32, i32
  }
  func.func @transform_4(%arg0: i32, %arg1: i32) -> (i32, i32, i32, i32) {
    %c0_i32 = arith.constant 0 : i32
    %c0_i32_0 = arith.constant 0 : i32
    %c0_i32_1 = arith.constant 0 : i32
    return %arg0, %arg1, %c0_i32, %c0_i32_0 : i32, i32, i32, i32
  }
}

</mosaic_0001>

<llo_original>
// kernel: tpu_custom_call.1
$region0: #{tpu_custom_call.1}
  #allocation0 [shape = 'u32[]', space=smem, size = 0x4, offset = 0x4, fixed_abs, tag = 'smem constant byte address 0x4 - core index']
  #allocation1 [shape = 'u32[144,128]{1,0:T(1,128)}', space=vmem, size = 0x12000, scoped, tag = 'internal scratch']
  %s0 = inlined_call_operand.vmem [shape: f32[2,4,64,32], index: 0, kind: input, shape index: {}]
  %s1 = inlined_call_operand.vmem [shape: f32[2,4,64,32], index: 1, kind: input, shape index: {}]
  %s2 = inlined_call_operand.vmem [shape: f32[2,4,64,32], index: 2, kind: input, shape index: {}]
  %s3 = inlined_call_operand.vmem [shape: f32[64,64], index: 3, kind: input, shape index: {}]
  %s4 = inlined_call_operand.vmem [shape: f32[2,4,64,32], index: 4, kind: output, shape index: {}]
  %s5 = sld [smem:[#allocation0]]
  $region49: #{tpu_custom_call.1} parent=0
    _
  %s7 = ssub.s32 1, %s5
  %s8 = scalar_select 0, %s7, %s5
  loop: start=0, step=1, limit=10
  $region2: #{tpu_custom_call.1} parent=0 // loop_pre_header
    _
  $region3: #{tpu_custom_call.1} parent=0 // loop_header
    %s10 = sphi 0, %s14
    %p11 = scmp.ge.s32.totalorder %s10, 10
    %s17 = sphi 0, %s29
    %s18 = sphi 0, %s25
    %s19 = sphi 0, %s17
    %s20 = sphi 0, %s18
    %s21 = sphi 0, %s19
    %s22 = sphi 0, %s20
    %s34 = sphi 0, %s36
    %s37 = sphi 0, %s34
    %s38 = sphi 0, %s37
    %s54 = sphi 0, %s38
    %s62 = sphi 0, %s64
    %s65 = sphi 0, %s62
    %s66 = sphi 0, %s65
    %s82 = sphi 0, %s66
    %s90 = sphi 0, %s92
    %s93 = sphi 0, %s90
    %s94 = sphi 0, %s93
    %s110 = sphi 0, %s94
    %s114 = sphi 0, %s114
    %s116 = sphi 0, %s114
    %s117 = sphi 0, %s116
    %s131 = sphi 0, %s117
    %s139 = sphi 0, %s141
    %s142 = sphi 0, %s139
    %s143 = sphi 0, %s142
    %s159 = sphi 0, %s143
  $region4: #{tpu_custom_call.1} parent=0 // loop_header_branch
    %13 = sbr.rel (%p11) target = $region8
  $region5: #{tpu_custom_call.1} parent=0 // loop_body
    %s15 = ssub.s32 %s10, 1
    %s16 = ssub.s32 %s10, 2
    %s23 = sadd.s32 1, %s18
    %p24 = scmp.ge.s32.totalorder %s23, 4
    %s25 = scalar_select %p24, 0, %s23
    %s26 = sadd.s32 1, %s17
    %s27 = scalar_select %p24, %s26, %s17
    %p28 = scmp.ge.s32.totalorder %s27, 2
    %s29 = scalar_select %p28, 0, %s27
    %s30 = ssub.s32 %s17, %s29
    %s31 = ssub.s32 %s18, %s25
    %s32 = sor.u32 %s30, %s31
    %p33 = scmp.eq.s32.totalorder %s32, 0
    %s35 = sadd.s32 %s34, 1
    %s36 = scalar_select %p33, %s34, %s35
    %p39 = pneg %p33
    %p40 = scmp.eq.s32.totalorder %s10, 7
    %p41 = por %p39, %p40
    %p42 = scmp.ne.s32.totalorder %s34, %s37
    %p43 = scmp.eq.s32.totalorder %s10, 0
    %p44 = por %p42, %p43
    %p45 = scmp.ne.s32.totalorder %s34, %s37
    %p46 = scmp.eq.s32.totalorder %s15, 7
    %p47 = por %p45, %p46
    %p48 = scmp.ne.s32.totalorder %s37, %s38
    %p49 = scmp.eq.s32.totalorder %s15, 0
    %p50 = por %p48, %p49
    %p51 = scmp.ne.s32.totalorder %s37, %s38
    %p52 = scmp.eq.s32.totalorder %s16, 7
    %p53 = por %p51, %p52
    %p55 = scmp.ne.s32.totalorder %s38, %s54
    %p56 = scmp.eq.s32.totalorder %s16, 0
    %p57 = por %p55, %p56
    %s58 = ssub.s32 %s17, %s29
    %s59 = ssub.s32 %s18, %s25
    %s60 = sor.u32 %s58, %s59
    %p61 = scmp.eq.s32.totalorder %s60, 0
    %s63 = sadd.s32 %s62, 1
    %s64 = scalar_select %p61, %s62, %s63
    %p67 = pneg %p61
    %p68 = scmp.eq.s32.totalorder %s10, 7
    %p69 = por %p67, %p68
    %p70 = scmp.ne.s32.totalorder %s62, %s65
    %p71 = scmp.eq.s32.totalorder %s10, 0
    %p72 = por %p70, %p71
    %p73 = scmp.ne.s32.totalorder %s62, %s65
    %p74 = scmp.eq.s32.totalorder %s15, 7
    %p75 = por %p73, %p74
    %p76 = scmp.ne.s32.totalorder %s65, %s66
    %p77 = scmp.eq.s32.totalorder %s15, 0
    %p78 = por %p76, %p77
    %p79 = scmp.ne.s32.totalorder %s65, %s66
    %p80 = scmp.eq.s32.totalorder %s16, 7
    %p81 = por %p79, %p80
    %p83 = scmp.ne.s32.totalorder %s66, %s82
    %p84 = scmp.eq.s32.totalorder %s16, 0
    %p85 = por %p83, %p84
    %s86 = ssub.s32 %s17, %s29
    %s87 = ssub.s32 %s18, %s25
    %s88 = sor.u32 %s86, %s87
    %p89 = scmp.eq.s32.totalorder %s88, 0
    %s91 = sadd.s32 %s90, 1
    %s92 = scalar_select %p89, %s90, %s91
    %p95 = pneg %p89
    %p96 = scmp.eq.s32.totalorder %s10, 7
    %p97 = por %p95, %p96
    %p98 = scmp.ne.s32.totalorder %s90, %s93
    %p99 = scmp.eq.s32.totalorder %s10, 0
    %p100 = por %p98, %p99
    %p101 = scmp.ne.s32.totalorder %s90, %s93
    %p102 = scmp.eq.s32.totalorder %s15, 7
    %p103 = por %p101, %p102
    %p104 = scmp.ne.s32.totalorder %s93, %s94
    %p105 = scmp.eq.s32.totalorder %s15, 0
    %p106 = por %p104, %p105
    %p107 = scmp.ne.s32.totalorder %s93, %s94
    %p108 = scmp.eq.s32.totalorder %s16, 7
    %p109 = por %p107, %p108
    %p111 = scmp.ne.s32.totalorder %s94, %s110
    %p112 = scmp.eq.s32.totalorder %s16, 0
    %p113 = por %p111, %p112
    %s115 = sadd.s32 %s114, 1
    %p118 = scmp.eq.s32.totalorder %s10, 7
    %p119 = scmp.ne.s32.totalorder %s114, %s116
    %p120 = scmp.eq.s32.totalorder %s10, 0
    %p121 = por %p119, %p120
    %p122 = scmp.ne.s32.totalorder %s114, %s116
    %p123 = scmp.eq.s32.totalorder %s15, 7
    %p124 = por %p122, %p123
    %p125 = scmp.ne.s32.totalorder %s116, %s117
    %p126 = scmp.eq.s32.totalorder %s15, 0
    %p127 = por %p125, %p126
    %p128 = scmp.ne.s32.totalorder %s116, %s117
    %p129 = scmp.eq.s32.totalorder %s16, 7
    %p130 = por %p128, %p129
    %p132 = scmp.ne.s32.totalorder %s117, %s131
    %p133 = scmp.eq.s32.totalorder %s16, 0
    %p134 = por %p132, %p133
    %s135 = ssub.s32 %s17, %s29
    %s136 = ssub.s32 %s18, %s25
    %s137 = sor.u32 %s135, %s136
    %p138 = scmp.eq.s32.totalorder %s137, 0
    %s140 = sadd.s32 %s139, 1
    %s141 = scalar_select %p138, %s139, %s140
    %p144 = pneg %p138
    %p145 = scmp.eq.s32.totalorder %s10, 7
    %p146 = por %p144, %p145
    %p147 = scmp.ne.s32.totalorder %s139, %s142
    %p148 = scmp.eq.s32.totalorder %s10, 0
    %p149 = por %p147, %p148
    %p150 = scmp.ne.s32.totalorder %s139, %s142
    %p151 = scmp.eq.s32.totalorder %s15, 7
    %p152 = por %p150, %p151
    %p153 = scmp.ne.s32.totalorder %s142, %s143
    %p154 = scmp.eq.s32.totalorder %s15, 0
    %p155 = por %p153, %p154
    %p156 = scmp.ne.s32.totalorder %s142, %s143
    %p157 = scmp.eq.s32.totalorder %s16, 7
    %p158 = por %p156, %p157
    %p160 = scmp.ne.s32.totalorder %s143, %s159
    %p161 = scmp.eq.s32.totalorder %s16, 0
    %p162 = por %p160, %p161
    %p163 = scmp.le.s32.totalorder 1, %s10
    %p164 = scmp.lt.s32.totalorder %s10, 9
    %p165 = pnand %p163, %p164
    %p166 = pneg %p165
    // Predicated region
    $region9: #{tpu_custom_call.1} parent=5 // pred_check
      _
    $region10: #{tpu_custom_call.1} parent=5 // pred_check_branch
      %168 = sbr.rel (%p165) target = $region12
    $region11: #{tpu_custom_call.1} parent=5 // pred_region
      %s169 = ssub.s32 %s10, 1
      // Predicated region
      $region13: #{tpu_custom_call.1} parent=11 // pred_check
        %p170 = pneg %p127
      $region14: #{tpu_custom_call.1} parent=11 // pred_check_branch
        %172 = sbr.rel (%p170) target = $region16
      $region15: #{tpu_custom_call.1} parent=11 // pred_region
        _
      $region16: #{tpu_custom_call.1} parent=11 // pred_fallthru
        _
    $region12: #{tpu_custom_call.1} parent=5 // pred_fallthru
      _
    %p173 = scmp.lt.s32.totalorder %s10, 8
    // Predicated region
    $region17: #{tpu_custom_call.1} parent=5 // pred_check
      %p174 = pneg %p173
    $region18: #{tpu_custom_call.1} parent=5 // pred_check_branch
      %176 = sbr.rel (%p174) target = $region20
    $region19: #{tpu_custom_call.1} parent=5 // pred_region
      // Predicated region
      $region21: #{tpu_custom_call.1} parent=19 // pred_check
        %p177 = pneg %p44
      $region22: #{tpu_custom_call.1} parent=19 // pred_check_branch
        %179 = sbr.rel (%p177) target = $region24
      $region23: #{tpu_custom_call.1} parent=19 // pred_region
        %p180 = scmp.lt.s32.totalorder %s17, 1
        %s181 = scalar_select %p180, %s17, 1
        %p182 = scmp.lt.s32.totalorder %s18, 3
        %s183 = scalar_select %p182, %s18, 3
        %s184 = smul.addr %s183, 8
        %s185 = smul.addr %s181, 32
        %s186 = sadd.s32 %s184, %s185
        %s187 = smul.addr %s186, 8
        %s188 = scalar_lea.vmem %s0, %s187
      $region24: #{tpu_custom_call.1} parent=19 // pred_fallthru
        _
      // Predicated region
      $region25: #{tpu_custom_call.1} parent=19 // pred_check
        %p189 = pneg %p72
      $region26: #{tpu_custom_call.1} parent=19 // pred_check_branch
        %191 = sbr.rel (%p189) target = $region28
      $region27: #{tpu_custom_call.1} parent=19 // pred_region
        %p192 = scmp.lt.s32.totalorder %s17, 1
        %s193 = scalar_select %p192, %s17, 1
        %p194 = scmp.lt.s32.totalorder %s18, 3
        %s195 = scalar_select %p194, %s18, 3
        %s196 = smul.addr %s195, 8
        %s197 = smul.addr %s193, 32
        %s198 = sadd.s32 %s196, %s197
        %s199 = smul.addr %s198, 8
        %s200 = scalar_lea.vmem %s1, %s199
      $region28: #{tpu_custom_call.1} parent=19 // pred_fallthru
        _
      // Predicated region
      $region29: #{tpu_custom_call.1} parent=19 // pred_check
        %p201 = pneg %p100
      $region30: #{tpu_custom_call.1} parent=19 // pred_check_branch
        %203 = sbr.rel (%p201) target = $region32
      $region31: #{tpu_custom_call.1} parent=19 // pred_region
        %p204 = scmp.lt.s32.totalorder %s17, 1
        %s205 = scalar_select %p204, %s17, 1
        %p206 = scmp.lt.s32.totalorder %s18, 3
        %s207 = scalar_select %p206, %s18, 3
        %s208 = smul.addr %s207, 8
        %s209 = smul.addr %s205, 32
        %s210 = sadd.s32 %s208, %s209
        %s211 = smul.addr %s210, 8
        %s212 = scalar_lea.vmem %s2, %s211
      $region32: #{tpu_custom_call.1} parent=19 // pred_fallthru
        _
    $region20: #{tpu_custom_call.1} parent=5 // pred_fallthru
      _
    %p213 = scmp.le.s32.totalorder 1, %s10
    %p214 = scmp.lt.s32.totalorder %s10, 9
    %p215 = pnand %p213, %p214
    %p216 = pneg %p215
    // Predicated region
    $region33: #{tpu_custom_call.1} parent=5 // pred_check
      _
    $region34: #{tpu_custom_call.1} parent=5 // pred_check_branch
      %218 = sbr.rel (%p215) target = $region36
    $region35: #{tpu_custom_call.1} parent=5 // pred_region
      %s219 = ssub.s32 %s10, 1
      %p220 = scmp.lt.s32.totalorder %s19, 1
      %s221 = scalar_select %p220, %s19, 1
      %p222 = scmp.lt.s32.totalorder %s20, 3
      %s223 = scalar_select %p222, %s20, 3
      %s224 = smul.addr %s223, 8
      %s225 = smul.addr %s221, 32
      %s226 = sadd.s32 %s224, %s225
      %s227 = smul.addr %s226, 8
      %s228 = scalar_lea.vmem %s0, %s227
      %p229 = pneg %p50
      %p230 = pneg %p47
      %p231 = scmp.lt.s32.totalorder %s19, 1
      %s232 = scalar_select %p231, %s19, 1
      %p233 = scmp.lt.s32.totalorder %s20, 3
      %s234 = scalar_select %p233, %s20, 3
      %s235 = smul.addr %s234, 8
      %s236 = smul.addr %s232, 32
      %s237 = sadd.s32 %s235, %s236
      %s238 = smul.addr %s237, 8
      %s239 = scalar_lea.vmem %s1, %s238
      %p240 = pneg %p78
      %p241 = pneg %p75
      %p242 = scmp.lt.s32.totalorder %s19, 1
      %s243 = scalar_select %p242, %s19, 1
      %p244 = scmp.lt.s32.totalorder %s20, 3
      %s245 = scalar_select %p244, %s20, 3
      %s246 = smul.addr %s245, 8
      %s247 = smul.addr %s243, 32
      %s248 = sadd.s32 %s246, %s247
      %s249 = smul.addr %s248, 8
      %s250 = scalar_lea.vmem %s2, %s249
      %p251 = pneg %p106
      %p252 = pneg %p103
      %p253 = pneg %p127
      %p254 = pneg %p124
      %p255 = pneg %p155
      %p256 = pneg %p152
      %p257 = scmp.lt.s32.totalorder %s19, 1
      %s258 = scalar_select %p257, %s19, 1
      %p259 = scmp.lt.s32.totalorder %s20, 3
      %s260 = scalar_select %p259, %s20, 3
      %s261 = smul.addr %s260, 8
      %s262 = smul.addr %s258, 32
      %s263 = sadd.s32 %s261, %s262
      %s264 = smul.addr %s263, 8
      %s265 = scalar_lea.vmem %s4, %s264
      %p266 = scmp.lt.s32.totalorder %s19, 1
      %s267 = scalar_select %p266, %s19, 1
      %p268 = scmp.lt.s32.totalorder %s20, 3
      %s269 = scalar_select %p268, %s20, 3
      %s270 = smul.addr %s269, 8
      %s271 = smul.addr %s267, 32
      %s272 = sadd.s32 %s270, %s271
      %s273 = smul.addr %s272, 8
      %s274 = scalar_lea.vmem %s0, %s273
      %p275 = scmp.lt.s32.totalorder %s19, 1
      %s276 = scalar_select %p275, %s19, 1
      %p277 = scmp.lt.s32.totalorder %s20, 3
      %s278 = scalar_select %p277, %s20, 3
      %s279 = smul.addr %s278, 8
      %s280 = smul.addr %s276, 32
      %s281 = sadd.s32 %s279, %s280
      %s282 = smul.addr %s281, 8
      %s283 = scalar_lea.vmem %s1, %s282
      %p284 = scmp.lt.s32.totalorder %s19, 1
      %s285 = scalar_select %p284, %s19, 1
      %p286 = scmp.lt.s32.totalorder %s20, 3
      %s287 = scalar_select %p286, %s20, 3
      %s288 = smul.addr %s287, 8
      %s289 = smul.addr %s285, 32
      %s290 = sadd.s32 %s288, %s289
      %s291 = smul.addr %s290, 8
      %s292 = scalar_lea.vmem %s2, %s291
      %p293 = scmp.lt.s32.totalorder %s19, 1
      %s294 = scalar_select %p293, %s19, 1
      %p295 = scmp.lt.s32.totalorder %s20, 3
      %s296 = scalar_select %p295, %s20, 3
      %s297 = smul.addr %s296, 8
      %s298 = smul.addr %s294, 32
      %s299 = sadd.s32 %s297, %s298
      %s300 = smul.addr %s299, 8
      %s301 = scalar_lea.vmem %s4, %s300
      %v302 = vld [vmem:[%s274] sm:$0xff]
      %v303 = vld [vmem:[%s274 + $0x8] sm:$0xff]
      %v304 = vld [vmem:[%s274 + $0x10] sm:$0xff]
      %v305 = vld [vmem:[%s274 + $0x18] sm:$0xff]
      %v306 = vld [vmem:[%s274 + $0x20] sm:$0xff]
      %v307 = vld [vmem:[%s274 + $0x28] sm:$0xff]
      %v308 = vld [vmem:[%s274 + $0x30] sm:$0xff]
      %v309 = vld [vmem:[%s274 + $0x38] sm:$0xff]
      %v310 = vld [vmem:[%s283] sm:$0xff]
      %v311 = vld [vmem:[%s283 + $0x8] sm:$0xff]
      %v312 = vld [vmem:[%s283 + $0x10] sm:$0xff]
      %v313 = vld [vmem:[%s283 + $0x18] sm:$0xff]
      %v314 = vld [vmem:[%s283 + $0x20] sm:$0xff]
      %v315 = vld [vmem:[%s283 + $0x28] sm:$0xff]
      %v316 = vld [vmem:[%s283 + $0x30] sm:$0xff]
      %v317 = vld [vmem:[%s283 + $0x38] sm:$0xff]
      %v318 = vld [vmem:[%s292] sm:$0xff]
      %v319 = vld [vmem:[%s292 + $0x8] sm:$0xff]
      %v320 = vld [vmem:[%s292 + $0x10] sm:$0xff]
      %v321 = vld [vmem:[%s292 + $0x18] sm:$0xff]
      %v322 = vld [vmem:[%s292 + $0x20] sm:$0xff]
      %v323 = vld [vmem:[%s292 + $0x28] sm:$0xff]
      %v324 = vld [vmem:[%s292 + $0x30] sm:$0xff]
      %v325 = vld [vmem:[%s292 + $0x38] sm:$0xff]
      %v326 = vld [vmem:[%s3] sm:$0xff]
      %v327 = vld [vmem:[%s3 + $0x8] sm:$0xff]
      %v328 = vld [vmem:[%s3 + $0x10] sm:$0xff]
      %v329 = vld [vmem:[%s3 + $0x18] sm:$0xff]
      %v330 = vld [vmem:[%s3 + $0x20] sm:$0xff]
      %v331 = vld [vmem:[%s3 + $0x28] sm:$0xff]
      %v332 = vld [vmem:[%s3 + $0x30] sm:$0xff]
      %v333 = vld [vmem:[%s3 + $0x38] sm:$0xff]
      %vm334 = vcmask 261120
      %v336 = vsel %vm334, %v302, 0
      %v339 = vsel %vm334, %v303, 0
      %v342 = vsel %vm334, %v304, 0
      %v345 = vsel %vm334, %v305, 0
      %v348 = vsel %vm334, %v306, 0
      %v351 = vsel %vm334, %v307, 0
      %v354 = vsel %vm334, %v308, 0
      %v357 = vsel %vm334, %v309, 0
      %v360 = vsel %vm334, %v310, 0
      %v363 = vsel %vm334, %v311, 0
      %v366 = vsel %vm334, %v312, 0
      %v369 = vsel %vm334, %v313, 0
      %v372 = vsel %vm334, %v314, 0
      %v375 = vsel %vm334, %v315, 0
      %v378 = vsel %vm334, %v316, 0
      %v381 = vsel %vm334, %v317, 0
      %383 = vmatprep.subr.mxu0 0.0
      %384 = vmatpush1.xpose.msra.mxu0 %v360
      %385 = vmatprep.subr.mxu0 0.0
      %386 = vmatpush1.xpose.msra.mxu0 %v363
      %387 = vmatprep.subr.mxu0 0.0
      %388 = vmatpush1.xpose.msra.mxu0 %v366
      %389 = vmatprep.subr.mxu0 0.0
      %390 = vmatpush1.xpose.msra.mxu0 %v369
      %391 = vmatprep.subr.mxu0 0.0
      %392 = vmatpush1.xpose.msra.mxu0 %v372
      %393 = vmatprep.subr.mxu0 0.0
      %394 = vmatpush1.xpose.msra.mxu0 %v375
      %395 = vmatprep.subr.mxu0 0.0
      %396 = vmatpush1.xpose.msra.mxu0 %v378
      %397 = vmatprep.subr.mxu0 0.0
      %398 = vmatpush1.xpose.msra.mxu0 %v381
      %399 = vmatprep.subr.mxu0 0.0
      %400 = vmatpush1.xpose.msra.mxu0 0.0
      %401 = vmatprep.subr.mxu0 0.0
      %402 = vmatpush1.xpose.msra.mxu0 0.0
      %403 = vmatprep.subr.mxu0 0.0
      %404 = vmatpush1.xpose.msra.mxu0 0.0
      %405 = vmatprep.subr.mxu0 0.0
      %406 = vmatpush1.xpose.msra.mxu0 0.0
      %407 = vmatprep.subr.mxu0 0.0
      %408 = vmatpush1.xpose.msra.mxu0 0.0
      %409 = vmatprep.subr.mxu0 0.0
      %410 = vmatpush1.xpose.msra.mxu0 0.0
      %411 = vmatprep.subr.mxu0 0.0
      %412 = vmatpush1.xpose.msra.mxu0 0.0
      %413 = vmatprep.subr.mxu0 0.0
      %414 = vmatpush1.xpose.msra.mxu0 0.0
      %415 = vmatprep.subr.mxu0 0.0
      %416 = vmatpush1.xpose.msra.mxu0 0.0
      %417 = vmatprep.subr.mxu0 0.0
      %418 = vmatpush1.xpose.msra.mxu0 0.0
      %419 = vmatprep.subr.mxu0 0.0
      %420 = vmatpush1.xpose.msra.mxu0 0.0
      %421 = vmatprep.subr.mxu0 0.0
      %422 = vmatpush1.xpose.msra.mxu0 0.0
      %423 = vmatprep.subr.mxu0 0.0
      %424 = vmatpush1.xpose.msra.mxu0 0.0
      %425 = vmatprep.subr.mxu0 0.0
      %426 = vmatpush1.xpose.msra.mxu0 0.0
      %427 = vmatprep.subr.mxu0 0.0
      %428 = vmatpush1.xpose.msra.mxu0 0.0
      %429 = vmatprep.subr.mxu0 0.0
      %430 = vmatpush1.xpose.msra.mxu0 0.0
      %431 = vmatprep.subr.mxu0 0.0
      %432 = vmatpush1.xpose.msra.mxu0 0.0
      %433 = vmatprep.subr.mxu0 0.0
      %434 = vmatpush1.xpose.msra.mxu0 0.0
      %435 = vmatprep.subr.mxu0 0.0
      %436 = vmatpush1.xpose.msra.mxu0 0.0
      %437 = vmatprep.subr.mxu0 0.0
      %438 = vmatpush1.xpose.msra.mxu0 0.0
      %439 = vmatprep.subr.mxu0 0.0
      %440 = vmatpush1.xpose.msra.mxu0 0.0
      %441 = vmatprep.subr.mxu0 0.0
      %442 = vmatpush1.xpose.msra.mxu0 0.0
      %443 = vmatprep.subr.mxu0 0.0
      %444 = vmatpush1.xpose.msra.mxu0 0.0
      %445 = vmatprep.subr.mxu0 0.0
      %446 = vmatpush1.xpose.msra.mxu0 0.0
      %447 = vmatprep.mubr.f32.mxu0 0.0
      %448 = vmatmul.mubr.f32.gmra.mrb[0].mxu0 %v336
      %v449 = vpop.f32.mrb[0].mxu0
      %v450 = vadd.f32 0.0, %v449
      %v451 = vpop.f32.mrb[0].mxu0
      %452 = vmatprep.mubr.f32.mxu0 0.0
      %453 = vmatmul.mubr.f32.gmra.mrb[0].mxu0 %v339
      %v454 = vpop.f32.mrb[0].mxu0
      %v455 = vadd.f32 0.0, %v454
      %v456 = vpop.f32.mrb[0].mxu0
      %457 = vmatprep.mubr.f32.mxu0 0.0
      %458 = vmatmul.mubr.f32.gmra.mrb[0].mxu0 %v342
      %v459 = vpop.f32.mrb[0].mxu0
      %v460 = vadd.f32 0.0, %v459
      %v461 = vpop.f32.mrb[0].mxu0
      %462 = vmatprep.mubr.f32.mxu0 0.0
      %463 = vmatmul.mubr.f32.gmra.mrb[0].mxu0 %v345
      %v464 = vpop.f32.mrb[0].mxu0
      %v465 = vadd.f32 0.0, %v464
      %v466 = vpop.f32.mrb[0].mxu0
      %467 = vmatprep.mubr.f32.mxu0 0.0
      %468 = vmatmul.mubr.f32.gmra.mrb[0].mxu0 %v348
      %v469 = vpop.f32.mrb[0].mxu0
      %v470 = vadd.f32 0.0, %v469
      %v471 = vpop.f32.mrb[0].mxu0
      %472 = vmatprep.mubr.f32.mxu0 0.0
      %473 = vmatmul.mubr.f32.gmra.mrb[0].mxu0 %v351
      %v474 = vpop.f32.mrb[0].mxu0
      %v475 = vadd.f32 0.0, %v474
      %v476 = vpop.f32.mrb[0].mxu0
      %477 = vmatprep.mubr.f32.mxu0 0.0
      %478 = vmatmul.mubr.f32.gmra.mrb[0].mxu0 %v354
      %v479 = vpop.f32.mrb[0].mxu0
      %v480 = vadd.f32 0.0, %v479
      %v481 = vpop.f32.mrb[0].mxu0
      %482 = vmatprep.mubr.f32.mxu0 0.0
      %483 = vmatmul.mubr.f32.gmra.mrb[0].mxu0 %v357
      %v484 = vpop.f32.mrb[0].mxu0
      %v485 = vadd.f32 0.0, %v484
      %v486 = vpop.f32.mrb[0].mxu0
      %487 = vdwg.mxu0
      %vm488 = vcmp.gt.f32.partialorder %v326, 0.0
      %vm489 = vcmp.gt.f32.partialorder %v327, 0.0
      %vm490 = vcmp.gt.f32.partialorder %v328, 0.0
      %vm491 = vcmp.gt.f32.partialorder %v329, 0.0
      %vm492 = vcmp.gt.f32.partialorder %v330, 0.0
      %vm493 = vcmp.gt.f32.partialorder %v331, 0.0
      %vm494 = vcmp.gt.f32.partialorder %v332, 0.0
      %vm495 = vcmp.gt.f32.partialorder %v333, 0.0
      %v496 = vsel %vm488, %v450, -inf
      %v497 = vsel %vm489, %v455, -inf
      %v498 = vsel %vm490, %v460, -inf
      %v499 = vsel %vm491, %v465, -inf
      %v500 = vsel %vm492, %v470, -inf
      %v501 = vsel %vm493, %v475, -inf
      %v502 = vsel %vm494, %v480, -inf
      %v503 = vsel %vm495, %v485, -inf
      %vm504 = vcmask 523264
      %v505 = vsel %vm504, %v496, -inf
      %506 = vmax.xlane.f32.xlu0 %v505
      %v507 = vpop.xlane.xlu0 %506
      %v508 = vsel %vm504, %v497, -inf
      %509 = vmax.xlane.f32.xlu0 %v508
      %v510 = vpop.xlane.xlu0 %509
      %v511 = vsel %vm504, %v498, -inf
      %512 = vmax.xlane.f32.xlu0 %v511
      %v513 = vpop.xlane.xlu0 %512
      %v514 = vsel %vm504, %v499, -inf
      %515 = vmax.xlane.f32.xlu0 %v514
      %v516 = vpop.xlane.xlu0 %515
      %v517 = vsel %vm504, %v500, -inf
      %518 = vmax.xlane.f32.xlu0 %v517
      %v519 = vpop.xlane.xlu0 %518
      %v520 = vsel %vm504, %v501, -inf
      %521 = vmax.xlane.f32.xlu0 %v520
      %v522 = vpop.xlane.xlu0 %521
      %v523 = vsel %vm504, %v502, -inf
      %524 = vmax.xlane.f32.xlu0 %v523
      %v525 = vpop.xlane.xlu0 %524
      %v526 = vsel %vm504, %v503, -inf
      %527 = vmax.xlane.f32.xlu0 %v526
      %v528 = vpop.xlane.xlu0 %527
      %v529 = vmul.f32 %v450, %v326
      %v530 = vmul.f32 %v455, %v327
      %v531 = vmul.f32 %v460, %v328
      %v532 = vmul.f32 %v465, %v329
      %v533 = vmul.f32 %v470, %v330
      %v534 = vmul.f32 %v475, %v331
      %v535 = vmul.f32 %v480, %v332
      %v536 = vmul.f32 %v485, %v333
      %v537 = vsel %vm504, %v529, 0.0
      %538 = vadd.xlane.f32.xlu0 %v537
      %v539 = vpop.xlane.xlu0 %538
      %v540 = vsel %vm504, %v530, 0.0
      %541 = vadd.xlane.f32.xlu0 %v540
      %v542 = vpop.xlane.xlu0 %541
      %v543 = vsel %vm504, %v531, 0.0
      %544 = vadd.xlane.f32.xlu0 %v543
      %v545 = vpop.xlane.xlu0 %544
      %v546 = vsel %vm504, %v532, 0.0
      %547 = vadd.xlane.f32.xlu0 %v546
      %v548 = vpop.xlane.xlu0 %547
      %v549 = vsel %vm504, %v533, 0.0
      %550 = vadd.xlane.f32.xlu0 %v549
      %v551 = vpop.xlane.xlu0 %550
      %v552 = vsel %vm504, %v534, 0.0
      %553 = vadd.xlane.f32.xlu0 %v552
      %v554 = vpop.xlane.xlu0 %553
      %v555 = vsel %vm504, %v535, 0.0
      %556 = vadd.xlane.f32.xlu0 %v555
      %v557 = vpop.xlane.xlu0 %556
      %v558 = vsel %vm504, %v536, 0.0
      %559 = vadd.xlane.f32.xlu0 %v558
      %v560 = vpop.xlane.xlu0 %559
      %v561 = vmul.f32 %v539, 0.015625
      %v562 = vmul.f32 %v542, 0.015625
      %v563 = vmul.f32 %v545, 0.015625
      %v564 = vmul.f32 %v548, 0.015625
      %v565 = vmul.f32 %v551, 0.015625
      %v566 = vmul.f32 %v554, 0.015625
      %v567 = vmul.f32 %v557, 0.015625
      %v568 = vmul.f32 %v560, 0.015625
      %v569 = vsub.f32 %v507, %v561
      %v570 = vsub.f32 %v510, %v562
      %v571 = vsub.f32 %v513, %v563
      %v572 = vsub.f32 %v516, %v564
      %v573 = vsub.f32 %v519, %v565
      %v574 = vsub.f32 %v522, %v566
      %v575 = vsub.f32 %v525, %v567
      %v576 = vsub.f32 %v528, %v568
      %v577 = vlaneseq
      %v578 = vshrl.u32 %v577, 7
      %v579 = vadd.s32 %v578, 8
      %v580 = vadd.s32 %v578, 16
      %v581 = vadd.s32 %v578, 24
      %v582 = vadd.s32 %v578, 32
      %v583 = vadd.s32 %v578, 40
      %v584 = vadd.s32 %v578, 48
      %v585 = vadd.s32 %v578, 56
      %v586 = vlaneseq
      %v587 = vand.u32 %v586, 127
      %vm588 = vcmp.eq.s32.totalorder %v578, %v587
      %vm589 = vcmp.eq.s32.totalorder %v579, %v587
      %vm590 = vcmp.eq.s32.totalorder %v580, %v587
      %vm591 = vcmp.eq.s32.totalorder %v581, %v587
      %vm592 = vcmp.eq.s32.totalorder %v582, %v587
      %vm593 = vcmp.eq.s32.totalorder %v583, %v587
      %vm594 = vcmp.eq.s32.totalorder %v584, %v587
      %vm595 = vcmp.eq.s32.totalorder %v585, %v587
      %v596 = vsel %vm588, 1, 0
      %v597 = vsel %vm589, 1, 0
      %v598 = vsel %vm590, 1, 0
      %v599 = vsel %vm591, 1, 0
      %v600 = vsel %vm592, 1, 0
      %v601 = vsel %vm593, 1, 0
      %v602 = vsel %vm594, 1, 0
      %v603 = vsel %vm595, 1, 0
      %v604 = vcvt.s32.f32 %v596
      %v605 = vcvt.s32.f32 %v597
      %v606 = vcvt.s32.f32 %v598
      %v607 = vcvt.s32.f32 %v599
      %v608 = vcvt.s32.f32 %v600
      %v609 = vcvt.s32.f32 %v601
      %v610 = vcvt.s32.f32 %v602
      %v611 = vcvt.s32.f32 %v603
      %v612 = vmul.f32 %v604, %v569
      %v613 = vmul.f32 %v605, %v570
      %v614 = vmul.f32 %v606, %v571
      %v615 = vmul.f32 %v607, %v572
      %v616 = vmul.f32 %v608, %v573
      %v617 = vmul.f32 %v609, %v574
      %v618 = vmul.f32 %v610, %v575
      %v619 = vmul.f32 %v611, %v576
      %v620 = vsel %vm504, %v612, 0.0
      %v621 = vsel %vm504, %v613, 0.0
      %v622 = vadd.f32 %v620, %v621
      %v623 = vsel %vm504, %v614, 0.0
      %v624 = vadd.f32 %v622, %v623
      %v625 = vsel %vm504, %v615, 0.0
      %v626 = vadd.f32 %v624, %v625
      %v627 = vsel %vm504, %v616, 0.0
      %v628 = vadd.f32 %v626, %v627
      %v629 = vsel %vm504, %v617, 0.0
      %v630 = vadd.f32 %v628, %v629
      %v631 = vsel %vm504, %v618, 0.0
      %v632 = vadd.f32 %v630, %v631
      %v633 = vsel %vm504, %v619, 0.0
      %v634 = vadd.f32 %v632, %v633
      %v635 = vrot.slane %v634, 4
      %v636 = vadd.f32 %v634, %v635
      %v637 = vrot.slane %v636, 2
      %v638 = vadd.f32 %v636, %v637
      %v639 = vrot.slane %v638, 1
      %v640 = vadd.f32 %v638, %v639
      %vm641 = vcmp.gt.f32.partialorder %v640, %v569
      %vm642 = vcmp.gt.f32.partialorder %v640, %v570
      %vm643 = vcmp.gt.f32.partialorder %v640, %v571
      %vm644 = vcmp.gt.f32.partialorder %v640, %v572
      %vm645 = vcmp.gt.f32.partialorder %v640, %v573
      %vm646 = vcmp.gt.f32.partialorder %v640, %v574
      %vm647 = vcmp.gt.f32.partialorder %v640, %v575
      %vm648 = vcmp.gt.f32.partialorder %v640, %v576
      %v649 = vsel %vm641, 1, 0
      %v650 = vsel %vm642, 1, 0
      %v651 = vsel %vm643, 1, 0
      %v652 = vsel %vm644, 1, 0
      %v653 = vsel %vm645, 1, 0
      %v654 = vsel %vm646, 1, 0
      %v655 = vsel %vm647, 1, 0
      %v656 = vsel %vm648, 1, 0
      %v657 = vcvt.s32.f32 %v649
      %v658 = vcvt.s32.f32 %v650
      %v659 = vcvt.s32.f32 %v651
      %v660 = vcvt.s32.f32 %v652
      %v661 = vcvt.s32.f32 %v653
      %v662 = vcvt.s32.f32 %v654
      %v663 = vcvt.s32.f32 %v655
      %v664 = vcvt.s32.f32 %v656
      %v665 = vsel %vm504, %v657, 0.0
      %666 = vadd.xlane.f32.xlu0 %v665
      %v667 = vpop.xlane.xlu0 %666
      %v668 = vsel %vm504, %v658, 0.0
      %669 = vadd.xlane.f32.xlu0 %v668
      %v670 = vpop.xlane.xlu0 %669
      %v671 = vsel %vm504, %v659, 0.0
      %672 = vadd.xlane.f32.xlu0 %v671
      %v673 = vpop.xlane.xlu0 %672
      %v674 = vsel %vm504, %v660, 0.0
      %675 = vadd.xlane.f32.xlu0 %v674
      %v676 = vpop.xlane.xlu0 %675
      %v677 = vsel %vm504, %v661, 0.0
      %678 = vadd.xlane.f32.xlu0 %v677
      %v679 = vpop.xlane.xlu0 %678
      %v680 = vsel %vm504, %v662, 0.0
      %681 = vadd.xlane.f32.xlu0 %v680
      %v682 = vpop.xlane.xlu0 %681
      %v683 = vsel %vm504, %v663, 0.0
      %684 = vadd.xlane.f32.xlu0 %v683
      %v685 = vpop.xlane.xlu0 %684
      %v686 = vsel %vm504, %v664, 0.0
      %687 = vadd.xlane.f32.xlu0 %v686
      %v688 = vpop.xlane.xlu0 %687
      %vm689 = vcmp.lt.f32.partialorder %v667, 25.0
      %vm690 = vcmp.lt.f32.partialorder %v670, 25.0
      %vm691 = vcmp.lt.f32.partialorder %v673, 25.0
      %vm692 = vcmp.lt.f32.partialorder %v676, 25.0
      %vm693 = vcmp.lt.f32.partialorder %v679, 25.0
      %vm694 = vcmp.lt.f32.partialorder %v682, 25.0
      %vm695 = vcmp.lt.f32.partialorder %v685, 25.0
      %vm696 = vcmp.lt.f32.partialorder %v688, 25.0
      %v697 = vmul.f32 %v450, 0.17677669
      %v698 = vmul.f32 %v455, 0.17677669
      %v699 = vmul.f32 %v460, 0.17677669
      %v700 = vmul.f32 %v465, 0.17677669
      %v701 = vmul.f32 %v470, 0.17677669
      %v702 = vmul.f32 %v475, 0.17677669
      %v703 = vmul.f32 %v480, 0.17677669
      %v704 = vmul.f32 %v485, 0.17677669
      %v705 = vsel %vm504, %v697, -inf
      %706 = vmax.xlane.f32.xlu0 %v705
      %v707 = vpop.xlane.xlu0 %706
      %v708 = vsel %vm504, %v698, -inf
      %709 = vmax.xlane.f32.xlu0 %v708
      %v710 = vpop.xlane.xlu0 %709
      %v711 = vsel %vm504, %v699, -inf
      %712 = vmax.xlane.f32.xlu0 %v711
      %v713 = vpop.xlane.xlu0 %712
      %v714 = vsel %vm504, %v700, -inf
      %715 = vmax.xlane.f32.xlu0 %v714
      %v716 = vpop.xlane.xlu0 %715
      %v717 = vsel %vm504, %v701, -inf
      %718 = vmax.xlane.f32.xlu0 %v717
      %v719 = vpop.xlane.xlu0 %718
      %v720 = vsel %vm504, %v702, -inf
      %721 = vmax.xlane.f32.xlu0 %v720
      %v722 = vpop.xlane.xlu0 %721
      %v723 = vsel %vm504, %v703, -inf
      %724 = vmax.xlane.f32.xlu0 %v723
      %v725 = vpop.xlane.xlu0 %724
      %v726 = vsel %vm504, %v704, -inf
      %727 = vmax.xlane.f32.xlu0 %v726
      %v728 = vpop.xlane.xlu0 %727
      %v729 = vsub.f32 %v697, %v707
      %v730 = vsub.f32 %v698, %v710
      %v731 = vsub.f32 %v699, %v713
      %v732 = vsub.f32 %v700, %v716
      %v733 = vsub.f32 %v701, %v719
      %v734 = vsub.f32 %v702, %v722
      %v735 = vsub.f32 %v703, %v725
      %v736 = vsub.f32 %v704, %v728
      %v737 = vmul.f32 %v729, 1.442695
      %v738 = vpow.pop %v737
      %v739 = vmul.f32 %v730, 1.442695
      %v740 = vpow.pop %v739
      %v741 = vmul.f32 %v731, 1.442695
      %v742 = vpow.pop %v741
      %v743 = vmul.f32 %v732, 1.442695
      %v744 = vpow.pop %v743
      %v745 = vmul.f32 %v733, 1.442695
      %v746 = vpow.pop %v745
      %v747 = vmul.f32 %v734, 1.442695
      %v748 = vpow.pop %v747
      %v749 = vmul.f32 %v735, 1.442695
      %v750 = vpow.pop %v749
      %v751 = vmul.f32 %v736, 1.442695
      %v752 = vpow.pop %v751
      %v753 = vsel %vm504, %v738, 0.0
      %754 = vadd.xlane.f32.xlu0 %v753
      %v755 = vpop.xlane.xlu0 %754
      %v756 = vsel %vm504, %v740, 0.0
      %757 = vadd.xlane.f32.xlu0 %v756
      %v758 = vpop.xlane.xlu0 %757
      %v759 = vsel %vm504, %v742, 0.0
      %760 = vadd.xlane.f32.xlu0 %v759
      %v761 = vpop.xlane.xlu0 %760
      %v762 = vsel %vm504, %v744, 0.0
      %763 = vadd.xlane.f32.xlu0 %v762
      %v764 = vpop.xlane.xlu0 %763
      %v765 = vsel %vm504, %v746, 0.0
      %766 = vadd.xlane.f32.xlu0 %v765
      %v767 = vpop.xlane.xlu0 %766
      %v768 = vsel %vm504, %v748, 0.0
      %769 = vadd.xlane.f32.xlu0 %v768
      %v770 = vpop.xlane.xlu0 %769
      %v771 = vsel %vm504, %v750, 0.0
      %772 = vadd.xlane.f32.xlu0 %v771
      %v773 = vpop.xlane.xlu0 %772
      %v774 = vsel %vm504, %v752, 0.0
      %775 = vadd.xlane.f32.xlu0 %v774
      %v776 = vpop.xlane.xlu0 %775
      %v777 = vrcp.pop %v755
      %v778 = vrcp.pop %v758
      %v779 = vrcp.pop %v761
      %v780 = vrcp.pop %v764
      %v781 = vrcp.pop %v767
      %v782 = vrcp.pop %v770
      %v783 = vrcp.pop %v773
      %v784 = vrcp.pop %v776
      %v785 = vmul.f32 %v738, %v777
      %v786 = vmul.f32 %v740, %v778
      %v787 = vmul.f32 %v742, %v779
      %v788 = vmul.f32 %v744, %v780
      %v789 = vmul.f32 %v746, %v781
      %v790 = vmul.f32 %v748, %v782
      %v791 = vmul.f32 %v750, %v783
      %v792 = vmul.f32 %v752, %v784
      %v794 = vsel %vm504, %v785, 0
      %v797 = vsel %vm504, %v786, 0
      %v800 = vsel %vm504, %v787, 0
      %v803 = vsel %vm504, %v788, 0
      %v806 = vsel %vm504, %v789, 0
      %v809 = vsel %vm504, %v790, 0
      %v812 = vsel %vm504, %v791, 0
      %v815 = vsel %vm504, %v792, 0
      %817 = vmatprep.subr.mxu0 0.0
      %818 = vmatpush1.msra.mxu0 %v318
      %819 = vmatprep.subr.mxu0 0.0
      %820 = vmatpush1.msra.mxu0 %v319
      %821 = vmatprep.subr.mxu0 0.0
      %822 = vmatpush1.msra.mxu0 %v320
      %823 = vmatprep.subr.mxu0 0.0
      %824 = vmatpush1.msra.mxu0 %v321
      %825 = vmatprep.subr.mxu0 0.0
      %826 = vmatpush1.msra.mxu0 %v322
      %827 = vmatprep.subr.mxu0 0.0
      %828 = vmatpush1.msra.mxu0 %v323
      %829 = vmatprep.subr.mxu0 0.0
      %830 = vmatpush1.msra.mxu0 %v324
      %831 = vmatprep.subr.mxu0 0.0
      %832 = vmatpush1.msra.mxu0 %v325
      %833 = vmatprep.subr.mxu0 0.0
      %834 = vmatpush1.msra.mxu0 0.0
      %835 = vmatprep.subr.mxu0 0.0
      %836 = vmatpush1.msra.mxu0 0.0
      %837 = vmatprep.subr.mxu0 0.0
      %838 = vmatpush1.msra.mxu0 0.0
      %839 = vmatprep.subr.mxu0 0.0
      %840 = vmatpush1.msra.mxu0 0.0
      %841 = vmatprep.subr.mxu0 0.0
      %842 = vmatpush1.msra.mxu0 0.0
      %843 = vmatprep.subr.mxu0 0.0
      %844 = vmatpush1.msra.mxu0 0.0
      %845 = vmatprep.subr.mxu0 0.0
      %846 = vmatpush1.msra.mxu0 0.0
      %847 = vmatprep.subr.mxu0 0.0
      %848 = vmatpush1.msra.mxu0 0.0
      %849 = vmatprep.subr.mxu0 0.0
      %850 = vmatpush1.msra.mxu0 0.0
      %851 = vmatprep.subr.mxu0 0.0
      %852 = vmatpush1.msra.mxu0 0.0
      %853 = vmatprep.subr.mxu0 0.0
      %854 = vmatpush1.msra.mxu0 0.0
      %855 = vmatprep.subr.mxu0 0.0
      %856 = vmatpush1.msra.mxu0 0.0
      %857 = vmatprep.subr.mxu0 0.0
      %858 = vmatpush1.msra.mxu0 0.0
      %859 = vmatprep.subr.mxu0 0.0
      %860 = vmatpush1.msra.mxu0 0.0
      %861 = vmatprep.subr.mxu0 0.0
      %862 = vmatpush1.msra.mxu0 0.0
      %863 = vmatprep.subr.mxu0 0.0
      %864 = vmatpush1.msra.mxu0 0.0
      %865 = vmatprep.subr.mxu0 0.0
      %866 = vmatpush1.msra.mxu0 0.0
      %867 = vmatprep.subr.mxu0 0.0
      %868 = vmatpush1.msra.mxu0 0.0
      %869 = vmatprep.subr.mxu0 0.0
      %870 = vmatpush1.msra.mxu0 0.0
      %871 = vmatprep.subr.mxu0 0.0
      %872 = vmatpush1.msra.mxu0 0.0
      %873 = vmatprep.subr.mxu0 0.0
      %874 = vmatpush1.msra.mxu0 0.0
      %875 = vmatprep.subr.mxu0 0.0
      %876 = vmatpush1.msra.mxu0 0.0
      %877 = vmatprep.subr.mxu0 0.0
      %878 = vmatpush1.msra.mxu0 0.0
      %879 = vmatprep.subr.mxu0 0.0
      %880 = vmatpush1.msra.mxu0 0.0
      %881 = vmatprep.mubr.f32.mxu0 0.0
      %882 = vmatmul.mubr.f32.gmra.mrb[0].mxu0 %v794
      %v883 = vpop.f32.mrb[0].mxu0
      %v884 = vadd.f32 0.0, %v883
      %v885 = vpop.f32.mrb[0].mxu0
      %886 = vmatprep.mubr.f32.mxu0 0.0
      %887 = vmatmul.mubr.f32.gmra.mrb[0].mxu0 %v797
      %v888 = vpop.f32.mrb[0].mxu0
      %v889 = vadd.f32 0.0, %v888
      %v890 = vpop.f32.mrb[0].mxu0
      %891 = vmatprep.mubr.f32.mxu0 0.0
      %892 = vmatmul.mubr.f32.gmra.mrb[0].mxu0 %v800
      %v893 = vpop.f32.mrb[0].mxu0
      %v894 = vadd.f32 0.0, %v893
      %v895 = vpop.f32.mrb[0].mxu0
      %896 = vmatprep.mubr.f32.mxu0 0.0
      %897 = vmatmul.mubr.f32.gmra.mrb[0].mxu0 %v803
      %v898 = vpop.f32.mrb[0].mxu0
      %v899 = vadd.f32 0.0, %v898
      %v900 = vpop.f32.mrb[0].mxu0
      %901 = vmatprep.mubr.f32.mxu0 0.0
      %902 = vmatmul.mubr.f32.gmra.mrb[0].mxu0 %v806
      %v903 = vpop.f32.mrb[0].mxu0
      %v904 = vadd.f32 0.0, %v903
      %v905 = vpop.f32.mrb[0].mxu0
      %906 = vmatprep.mubr.f32.mxu0 0.0
      %907 = vmatmul.mubr.f32.gmra.mrb[0].mxu0 %v809
      %v908 = vpop.f32.mrb[0].mxu0
      %v909 = vadd.f32 0.0, %v908
      %v910 = vpop.f32.mrb[0].mxu0
      %911 = vmatprep.mubr.f32.mxu0 0.0
      %912 = vmatmul.mubr.f32.gmra.mrb[0].mxu0 %v812
      %v913 = vpop.f32.mrb[0].mxu0
      %v914 = vadd.f32 0.0, %v913
      %v915 = vpop.f32.mrb[0].mxu0
      %916 = vmatprep.mubr.f32.mxu0 0.0
      %917 = vmatmul.mubr.f32.gmra.mrb[0].mxu0 %v815
      %v918 = vpop.f32.mrb[0].mxu0
      %v919 = vadd.f32 0.0, %v918
      %v920 = vpop.f32.mrb[0].mxu0
      %921 = vdwg.mxu0
      %v922 = vsel %vm334, %v318, 0.0
      %v923 = vsel %vm334, %v319, 0.0
      %v924 = vadd.f32 %v922, %v923
      %v925 = vsel %vm334, %v320, 0.0
      %v926 = vadd.f32 %v924, %v925
      %v927 = vsel %vm334, %v321, 0.0
      %v928 = vadd.f32 %v926, %v927
      %v929 = vsel %vm334, %v322, 0.0
      %v930 = vadd.f32 %v928, %v929
      %v931 = vsel %vm334, %v323, 0.0
      %v932 = vadd.f32 %v930, %v931
      %v933 = vsel %vm334, %v324, 0.0
      %v934 = vadd.f32 %v932, %v933
      %v935 = vsel %vm334, %v325, 0.0
      %v936 = vadd.f32 %v934, %v935
      %v937 = vrot.slane %v936, 4
      %v938 = vadd.f32 %v936, %v937
      %v939 = vrot.slane %v938, 2
      %v940 = vadd.f32 %v938, %v939
      %v941 = vrot.slane %v940, 1
      %v942 = vadd.f32 %v940, %v941
      %v943 = vrcp.pop 64.0
      %v944 = vmul.f32 %v942, %v943
      %v945 = vsel %vm689, 1, 0
      %v946 = vsel %vm690, 1, 0
      %v947 = vsel %vm691, 1, 0
      %v948 = vsel %vm692, 1, 0
      %v949 = vsel %vm693, 1, 0
      %v950 = vsel %vm694, 1, 0
      %v951 = vsel %vm695, 1, 0
      %v952 = vsel %vm696, 1, 0
      %vm953 = vcmp.eq.s32.totalorder %v945, 1
      %vm954 = vcmp.eq.s32.totalorder %v946, 1
      %vm955 = vcmp.eq.s32.totalorder %v947, 1
      %vm956 = vcmp.eq.s32.totalorder %v948, 1
      %vm957 = vcmp.eq.s32.totalorder %v949, 1
      %vm958 = vcmp.eq.s32.totalorder %v950, 1
      %vm959 = vcmp.eq.s32.totalorder %v951, 1
      %vm960 = vcmp.eq.s32.totalorder %v952, 1
      %v961 = vsel %vm953, %v884, %v944
      %v962 = vsel %vm954, %v889, %v944
      %v963 = vsel %vm955, %v894, %v944
      %v964 = vsel %vm956, %v899, %v944
      %v965 = vsel %vm957, %v904, %v944
      %v966 = vsel %vm958, %v909, %v944
      %v967 = vsel %vm959, %v914, %v944
      %v968 = vsel %vm960, %v919, %v944
      %969 = vst.msk [vmem:[%s301] sm:$0xff] %vm334, %v961
      %970 = vst.msk [vmem:[%s301 + $0x8] sm:$0xff] %vm334, %v962
      %971 = vst.msk [vmem:[%s301 + $0x10] sm:$0xff] %vm334, %v963
      %972 = vst.msk [vmem:[%s301 + $0x18] sm:$0xff] %vm334, %v964
      %973 = vst.msk [vmem:[%s301 + $0x20] sm:$0xff] %vm334, %v965
      %974 = vst.msk [vmem:[%s301 + $0x28] sm:$0xff] %vm334, %v966
      %975 = vst.msk [vmem:[%s301 + $0x30] sm:$0xff] %vm334, %v967
      %976 = vst.msk [vmem:[%s301 + $0x38] sm:$0xff] %vm334, %v968
      %p977 = scmp.lt.s32.totalorder %s19, 1
      %s978 = scalar_select %p977, %s19, 1
      %p979 = scmp.lt.s32.totalorder %s20, 3
      %s980 = scalar_select %p979, %s20, 3
      %s981 = smul.addr %s980, 8
      %s982 = smul.addr %s978, 32
      %s983 = sadd.s32 %s981, %s982
      %s984 = smul.addr %s983, 8
      %s985 = scalar_lea.vmem %s4, %s984
      // Predicated region
      $region37: #{tpu_custom_call.1} parent=35 // pred_check
        %p986 = pneg %p152
      $region38: #{tpu_custom_call.1} parent=35 // pred_check_branch
        %988 = sbr.rel (%p986) target = $region40
      $region39: #{tpu_custom_call.1} parent=35 // pred_region
        _
      $region40: #{tpu_custom_call.1} parent=35 // pred_fallthru
        _
    $region36: #{tpu_custom_call.1} parent=5 // pred_fallthru
      _
    %p989 = scmp.le.s32.totalorder 2, %s10
    // Predicated region
    $region41: #{tpu_custom_call.1} parent=5 // pred_check
      %p990 = pneg %p989
    $region42: #{tpu_custom_call.1} parent=5 // pred_check_branch
      %992 = sbr.rel (%p990) target = $region44
    $region43: #{tpu_custom_call.1} parent=5 // pred_region
      %s993 = ssub.s32 %s10, 2
      // Predicated region
      $region45: #{tpu_custom_call.1} parent=43 // pred_check
        %p994 = pneg %p158
      $region46: #{tpu_custom_call.1} parent=43 // pred_check_branch
        %996 = sbr.rel (%p994) target = $region48
      $region47: #{tpu_custom_call.1} parent=43 // pred_region
        %p997 = scmp.lt.s32.totalorder %s21, 1
        %s998 = scalar_select %p997, %s21, 1
        %p999 = scmp.lt.s32.totalorder %s22, 3
        %s1000 = scalar_select %p999, %s22, 3
        %s1001 = smul.addr %s1000, 8
        %s1002 = smul.addr %s998, 32
        %s1003 = sadd.s32 %s1001, %s1002
        %s1004 = smul.addr %s1003, 8
        %s1005 = scalar_lea.vmem %s4, %s1004
      $region48: #{tpu_custom_call.1} parent=43 // pred_fallthru
        _
    $region44: #{tpu_custom_call.1} parent=5 // pred_fallthru
      _
  $region6: #{tpu_custom_call.1} parent=0 // loop_footer
    %s14 = sadd.s32 1, %s10
  $region7: #{tpu_custom_call.1} parent=0 // loop_footer_branch
    %9 = sbr.rel target = $region3
  $region8: #{tpu_custom_call.1} parent=0 // loop_exit
    _

</llo_original>
